<compile_context>
chip_gen: v6e
topology: v6e:2x2x1
jax: 0.10.0
libtpu: 0.0.40
codegen_flags: <defaults>
</compile_context>

<pallas_src>
import jax
import jax.numpy as jnp
from jax.experimental import pallas as pl
from jax.experimental.pallas import tpu as pltpu


def _round_up(x, m):
    return ((x + m - 1) // m) * m


def _make_rotate_kernel(hw_pad, tile_p, compute_dtype, out_dtype):
    def rotate_kernel(src_ref, x_ref, o_ref, sel_ref):
        # src_ref: VMEM (1, TILE_P) int32 -- flat source pixel index per output
        #          pixel of this column tile, -1 == "fill with zero".
        # x_ref:   VMEM (TILE_NC, hw_pad) input planes (lane-dense).
        # o_ref:   VMEM (TILE_NC, TILE_P) rotated output columns.
        # sel_ref: VMEM scratch (hw_pad, TILE_P) one-hot selection, built once per
        #          column tile and reused across all plane tiles.
        @pl.when(pl.program_id(1) == 0)
        def _build_sel():
            q = jax.lax.broadcasted_iota(jnp.int32, (hw_pad, tile_p), 0)
            sel_ref[...] = (q == src_ref[...]).astype(compute_dtype)

        o_ref[...] = jnp.dot(
            x_ref[...], sel_ref[...], preferred_element_type=jnp.float32
        ).astype(out_dtype)

    return rotate_kernel


def rotate_nearest(image, angle_deg):
    """torchvision-style F.rotate(image, angle_deg): nearest interpolation,
    expand=False, rotation about the image centre, zero fill. image: (N,C,H,W)."""
    n, c, h, w = image.shape
    nc, hw = n * c, h * w

    # bf16 one-hot matmul is exact (sel entries are 0/1), so bf16 inputs take the
    # fast single-pass bf16 MXU path on v6e/v7x; everything else stays f32.
    compute_dtype = jnp.bfloat16 if image.dtype == jnp.bfloat16 else jnp.float32

    # Lane-dense padding.
    hw_pad = _round_up(hw, 128)
    nc_pad = _round_up(nc, 8)

    # Tile sizes: big MXU M tile; output-column tile multiple of 128.
    tile_nc = min(nc_pad, 256)
    while nc_pad % tile_nc:
        tile_nc -= 8
    tile_p = min(hw_pad, 1024)
    while hw_pad % tile_p:
        tile_p -= 128

    # --- O(hw) inverse nearest-neighbour map (angle-dependent, computed once) ---
    theta = jnp.deg2rad(jnp.asarray(angle_deg, jnp.float32))
    cos_t, sin_t = jnp.cos(theta), jnp.sin(theta)
    y_c = (jnp.arange(h, dtype=jnp.float32) - (h - 1) * 0.5)[:, None]
    x_c = (jnp.arange(w, dtype=jnp.float32) - (w - 1) * 0.5)[None, :]
    src_x = cos_t * x_c - sin_t * y_c + (w - 1) * 0.5
    src_y = sin_t * x_c + cos_t * y_c + (h - 1) * 0.5
    sx = jnp.floor(src_x + 0.5).astype(jnp.int32)
    sy = jnp.floor(src_y + 0.5).astype(jnp.int32)
    valid = (sx >= 0) & (sx < w) & (sy >= 0) & (sy < h)
    flat_src = jnp.where(valid, sy * w + sx, -1).reshape(-1)            # (hw,)
    flat_src_pad = jnp.full((1, hw_pad), -1, jnp.int32).at[0, :hw].set(flat_src)

    # Lane-dense plane layout, padded.
    planes = image.reshape(nc, hw).astype(compute_dtype)
    planes = jnp.pad(planes, ((0, nc_pad - nc), (0, hw_pad - hw)))

    grid = (hw_pad // tile_p, nc_pad // tile_nc)  # (column tiles, plane tiles)

    # Explicit scoped-VMEM budget: sel scratch (1 copy) + double-buffered blocks
    # + headroom for the iota/compare temporaries in the sel build.
    cbytes = jnp.dtype(compute_dtype).itemsize
    obytes = jnp.dtype(image.dtype).itemsize
    vmem_need = (hw_pad * tile_p * cbytes
                 + 2 * tile_nc * hw_pad * cbytes
                 + 2 * tile_nc * tile_p * obytes
                 + 2 * tile_p * 4
                 + hw_pad * tile_p * 8)
    vmem_limit = int(min(max(vmem_need * 3 // 2, 32 << 20), 100 << 20))

    out = pl.pallas_call(
        _make_rotate_kernel(hw_pad, tile_p, compute_dtype, image.dtype),
        out_shape=jax.ShapeDtypeStruct((nc_pad, hw_pad), image.dtype),
        grid_spec=pltpu.PrefetchScalarGridSpec(
            num_scalar_prefetch=0,
            grid=grid,
            in_specs=[
                pl.BlockSpec((1, tile_p), lambda p, i: (0, p)),        # flat src map
                pl.BlockSpec((tile_nc, hw_pad), lambda p, i: (i, 0)),  # planes
            ],
            out_specs=pl.BlockSpec((tile_nc, tile_p), lambda p, i: (i, p)),
            scratch_shapes=[pltpu.VMEM((hw_pad, tile_p), compute_dtype)],
        ),
        compiler_params=pltpu.CompilerParams(
            # Column axis parallel (megacore); plane axis MUST stay arbitrary
            # because the cached sel scratch is built at plane index 0.
            dimension_semantics=("parallel", "arbitrary"),
            vmem_limit_bytes=vmem_limit,
        ),
    )(flat_src_pad, planes)

    return out[:nc, :hw].reshape(n, c, h, w)


def rotation_attack(image, key, max_angle_deg=30.0):
    """Pallas equivalent of RotationAttack.forward: rotate by
    max_angle_deg * uniform(-1, 1) (deterministic given `key`)."""
    rand_num = jax.random.uniform(key, (), minval=-1.0, maxval=1.0, dtype=jnp.float32)
    return rotate_nearest(image, max_angle_deg * rand_num)


def _rotate_reference(image, angle_deg):
    """Pure-JAX reference with identical semantics (nearest, zero fill)."""
    n, c, h, w = image.shape
    theta = jnp.deg2rad(jnp.asarray(angle_deg, jnp.float32))
    cos_t, sin_t = jnp.cos(theta), jnp.sin(theta)
    y_c = (jnp.arange(h, dtype=jnp.float32) - (h - 1) * 0.5)[:, None]
    x_c = (jnp.arange(w, dtype=jnp.float32) - (w - 1) * 0.5)[None, :]
    src_x = cos_t * x_c - sin_t * y_c + (w - 1) * 0.5
    src_y = sin_t * x_c + cos_t * y_c + (h - 1) * 0.5
    sx = jnp.floor(src_x + 0.5).astype(jnp.int32)
    sy = jnp.floor(src_y + 0.5).astype(jnp.int32)
    valid = (sx >= 0) & (sx < w) & (sy >= 0) & (sy < h)
    sxc = jnp.clip(sx, 0, w - 1)
    syc = jnp.clip(sy, 0, h - 1)
    gathered = image[:, :, syc, sxc]
    return jnp.where(valid[None, None, :, :], gathered,
                     jnp.zeros((), image.dtype)).astype(image.dtype)


if __name__ == "__main__":
    key = jax.random.PRNGKey(0)
    k_img, k_angle = jax.random.split(key)

    x = jax.random.normal(k_img, (2, 4, 16, 16), dtype=jnp.float32)

    out = rotation_attack(x, k_angle, max_angle_deg=30.0)
    out = jax.block_until_ready(out)

    # Reference with the same (deterministic) random angle.
    rand_num = jax.random.uniform(k_angle, (), minval=-1.0, maxval=1.0,
                                  dtype=jnp.float32)
    ref = _rotate_reference(x, 30.0 * rand_num)

    assert out.shape == x.shape, out.shape
    assert jnp.allclose(out, ref, atol=1e-5, rtol=1e-5), \
        "mismatch vs reference rotation"

    print("KERNEL_OK")
</pallas_src>

<mosaic_0001>
module attributes {stable_mosaic.version = 11 : i64} {
  func.func @rotate_kernel(%arg0: i32, %arg1: i32, %arg2: memref<1x256xi32, #tpu.memory_space<vmem>>, %arg3: memref<8x256xf32, #tpu.memory_space<vmem>>, %arg4: memref<8x256xf32, #tpu.memory_space<vmem>>, %arg5: memref<256x256xf32, #tpu.memory_space<vmem>>) attributes {dimension_semantics = [#tpu.dimension_semantics<parallel>, #tpu.dimension_semantics<arbitrary>], iteration_bounds = array<i64: 1, 1>, scalar_prefetch = 0 : i64, scratch_operands = 1 : i64, tpu.core_type = #tpu.core_type<tc>, window_params = [{transform_indices = @transform_0, window_bounds = array<i64: 1, 256>}, {transform_indices = @transform_1, window_bounds = array<i64: 8, 256>}, {transform_indices = @transform_2, window_bounds = array<i64: 8, 256>}]} {
    %c0_i32 = arith.constant 0 : i32
    %0 = arith.cmpi eq, %arg1, %c0_i32 : i32
    %1 = arith.extui %0 : i1 to i32
    %c0_i32_0 = arith.constant 0 : i32
    %2 = arith.cmpi ne, %1, %c0_i32_0 : i32
    scf.if %2 {
      %7 = tpu.iota {dimensions = array<i32: 0>} : vector<256x256xi32>
      %c0_6 = arith.constant 0 : index
      %c0_7 = arith.constant 0 : index
      %8 = vector.load %arg2[%c0_6, %c0_7] : memref<1x256xi32, #tpu.memory_space<vmem>>, vector<1x256xi32>
      %9 = vector.broadcast %8 : vector<1x256xi32> to vector<256x256xi32>
      %10 = arith.cmpi eq, %7, %9 : vector<256x256xi32>
      %11 = arith.extui %10 : vector<256x256xi1> to vector<256x256xi32>
      %12 = arith.sitofp %11 : vector<256x256xi32> to vector<256x256xf32>
      %c0_8 = arith.constant 0 : index
      %c0_9 = arith.constant 0 : index
      %13 = vector.load %arg5[%c0_8, %c0_9] : memref<256x256xf32, #tpu.memory_space<vmem>>, vector<256x256xf32>
      tpu.vector_store %arg5[%c0_8, %c0_9], %12 {strides = array<i32>} : memref<256x256xf32, #tpu.memory_space<vmem>>, vector<256x256xf32>,
    } else {
    }
    %c0 = arith.constant 0 : index
    %c0_1 = arith.constant 0 : index
    %3 = vector.load %arg3[%c0, %c0_1] : memref<8x256xf32, #tpu.memory_space<vmem>>, vector<8x256xf32>
    %c0_2 = arith.constant 0 : index
    %c0_3 = arith.constant 0 : index
    %4 = vector.load %arg5[%c0_2, %c0_3] : memref<256x256xf32, #tpu.memory_space<vmem>>, vector<256x256xf32>
    %cst = arith.constant dense<0.000000e+00> : vector<8x256xf32>
    %5 = tpu.matmul %3, %4, %cst {dimension_numbers = #tpu.dot_dimension_numbers<[1], [0], [0], [1], [0, 0, 1, 1], [], []>} : vector<8x256xf32>, vector<256x256xf32>, vector<8x256xf32> -> vector<8x256xf32>
    %c0_4 = arith.constant 0 : index
    %c0_5 = arith.constant 0 : index
    %6 = vector.load %arg4[%c0_4, %c0_5] : memref<8x256xf32, #tpu.memory_space<vmem>>, vector<8x256xf32>
    tpu.vector_store %arg4[%c0_4, %c0_5], %5 {strides = array<i32>} : memref<8x256xf32, #tpu.memory_space<vmem>>, vector<8x256xf32>,
    return
  }
  func.func @transform_0(%arg0: i32, %arg1: i32) -> (i32, i32) {
    %c0_i32 = arith.constant 0 : i32
    %c0_i32_0 = arith.constant 0 : i32
    return %c0_i32, %arg0 : i32, i32
  }
  func.func @transform_1(%arg0: i32, %arg1: i32) -> (i32, i32) {
    %c0_i32 = arith.constant 0 : i32
    %c0_i32_0 = arith.constant 0 : i32
    return %arg1, %c0_i32 : i32, i32
  }
  func.func @transform_2(%arg0: i32, %arg1: i32) -> (i32, i32) {
    %c0_i32 = arith.constant 0 : i32
    return %arg1, %arg0 : i32, i32
  }
}

</mosaic_0001>

<llo_original>
// kernel: tpu_custom_call.1
$region0: #{tpu_custom_call.1}
  #allocation0 [shape = 'u32[]', space=smem, size = 0x4, offset = 0x4, fixed_abs, tag = 'smem constant byte address 0x4 - core index']
  #allocation1 [shape = 'u32[144,128]{1,0:T(1,128)}', space=vmem, size = 0x12000, scoped, tag = 'internal scratch']
  #allocation2 [shape = 'f32[256,256]{1,0:T(8,128)}', space=vmem, size = 0x40000, scoped, tag = 'scratch operand']
  %s0 = inlined_call_operand.hbm [shape: s32[1,256], index: 0, kind: input, shape index: {}]
  %s1 = inlined_call_operand.hbm [shape: f32[8,256], index: 1, kind: input, shape index: {}]
  %s2 = inlined_call_operand.hbm [shape: f32[8,256], index: 2, kind: output, shape index: {}]
  %s3 = sld [smem:[#allocation0]]
  $region30: #{tpu_custom_call.1} parent=0
    _
  %s5 = ssub.s32 1, %s3
  %s6 = scalar_select 0, %s5, %s3
  $region1: #{tpu_custom_call.1} parent=0
    #allocation3 [shape = 'u8[1024]{0}', space=vmem, size = 0x400, scoped, tag = 'input window, operand 0, single buffered']
    #allocation4 [shape = 's32[1]{0}', space=sflag, size = 0x4, scoped, tag = 'scoped memory for tpu_custom_call.1']
    #allocation5 [shape = 's32[1]{0}', space=sflag, size = 0x4, scoped, tag = 'scoped memory for tpu_custom_call.1']
    #allocation6 [shape = 'u8[8192]{0}', space=vmem, size = 0x2000, scoped, tag = 'input window, operand 1, single buffered']
    #allocation7 [shape = 's32[1]{0}', space=sflag, size = 0x4, scoped, tag = 'scoped memory for tpu_custom_call.1']
    #allocation8 [shape = 'u8[8192]{0}', space=vmem, size = 0x2000, scoped, tag = 'output window, operand 0, single buffered']
    %7 = vsyncpa [#allocation4], 0
    %8 = vsyncpa [#allocation7], 0
    %9 = vsyncpa [#allocation5], 0
    // Predicated region
    $region2: #{tpu_custom_call.1} parent=1 // pred_check
      _
    $region3: #{tpu_custom_call.1} parent=1 // pred_check_branch
      %11 = sbr.rel (0) target = $region5
    $region4: #{tpu_custom_call.1} parent=1 // pred_region
      %s13 = ssub.s32 32, 32
      %14 = vsyncadd [#allocation4], %s13
      %s16 = sshll.u32 [#allocation3], 4
      %s17 = int_to_ptr.vmem [resolvable:$true] %s16
      %19 = dma.hbm_to_vmem [thread:$0]  %s0, 32, %s17, [#allocation4]
    $region5: #{tpu_custom_call.1} parent=1 // pred_fallthru
      _
    // Predicated region
    $region6: #{tpu_custom_call.1} parent=1 // pred_check
      _
    $region7: #{tpu_custom_call.1} parent=1 // pred_check_branch
      %21 = sbr.rel (0) target = $region9
    $region8: #{tpu_custom_call.1} parent=1 // pred_region
      %s23 = ssub.s32 256, 256
      %24 = vsyncadd [#allocation7], %s23
      %s26 = sshll.u32 [#allocation6], 4
      %s27 = int_to_ptr.vmem [resolvable:$true] %s26
      %29 = dma.hbm_to_vmem [thread:$0]  %s1, 256, %s27, [#allocation7]
    $region9: #{tpu_custom_call.1} parent=1 // pred_fallthru
      _
    // Predicated region
    $region10: #{tpu_custom_call.1} parent=1 // pred_check
      _
    $region11: #{tpu_custom_call.1} parent=1 // pred_check_branch
      %31 = sbr.rel (0) target = $region13
    $region12: #{tpu_custom_call.1} parent=1 // pred_region
      %32 = dma.done [#allocation4], 32
    $region13: #{tpu_custom_call.1} parent=1 // pred_fallthru
      _
    // Predicated region
    $region14: #{tpu_custom_call.1} parent=1 // pred_check
      _
    $region15: #{tpu_custom_call.1} parent=1 // pred_check_branch
      %34 = sbr.rel (0) target = $region17
    $region16: #{tpu_custom_call.1} parent=1 // pred_region
      %35 = dma.done [#allocation7], 256
    $region17: #{tpu_custom_call.1} parent=1 // pred_fallthru
      _
    %p36 = scmp.eq.s32.totalorder 0, 0
    // Predicated region
    $region18: #{tpu_custom_call.1} parent=1 // pred_check
      %p37 = pneg %p36
    $region19: #{tpu_custom_call.1} parent=1 // pred_check_branch
      %39 = sbr.rel (%p37) target = $region21
    $region20: #{tpu_custom_call.1} parent=1 // pred_region
      %v40 = vlaneseq
      %v41 = vshrl.u32 %v40, 7
      %v42 = vadd.s32 %v41, 8
      %v43 = vadd.s32 %v41, 16
      %v44 = vadd.s32 %v41, 24
      %v45 = vadd.s32 %v41, 32
      %v46 = vadd.s32 %v41, 40
      %v47 = vadd.s32 %v41, 48
      %v48 = vadd.s32 %v41, 56
      %v49 = vadd.s32 %v41, 64
      %v50 = vadd.s32 %v41, 72
      %v51 = vadd.s32 %v41, 80
      %v52 = vadd.s32 %v41, 88
      %v53 = vadd.s32 %v41, 96
      %v54 = vadd.s32 %v41, 104
      %v55 = vadd.s32 %v41, 112
      %v56 = vadd.s32 %v41, 120
      %v57 = vadd.s32 %v41, 128
      %v58 = vadd.s32 %v41, 136
      %v59 = vadd.s32 %v41, 144
      %v60 = vadd.s32 %v41, 152
      %v61 = vadd.s32 %v41, 160
      %v62 = vadd.s32 %v41, 168
      %v63 = vadd.s32 %v41, 176
      %v64 = vadd.s32 %v41, 184
      %v65 = vadd.s32 %v41, 192
      %v66 = vadd.s32 %v41, 200
      %v67 = vadd.s32 %v41, 208
      %v68 = vadd.s32 %v41, 216
      %v69 = vadd.s32 %v41, 224
      %v70 = vadd.s32 %v41, 232
      %v71 = vadd.s32 %v41, 240
      %v72 = vadd.s32 %v41, 248
      %v73 = vld [vmem:[#allocation3] sm:$0x3]
      %v74 = vlaneseq
      %v75 = vshrl.u32 %v74, 7
      %v76 = vsub.s32 0, %v75
      %v77 = vrot.slane %v73, %v76
      %v78 = vlaneseq
      %v79 = vshrl.u32 %v78, 7
      %v80 = vsub.s32 1, %v79
      %v81 = vrot.slane %v73, %v80
      %vm82 = vcmp.eq.s32.totalorder %v41, %v77
      %vm83 = vcmp.eq.s32.totalorder %v41, %v81
      %vm84 = vcmp.eq.s32.totalorder %v42, %v77
      %vm85 = vcmp.eq.s32.totalorder %v42, %v81
      %vm86 = vcmp.eq.s32.totalorder %v43, %v77
      %vm87 = vcmp.eq.s32.totalorder %v43, %v81
      %vm88 = vcmp.eq.s32.totalorder %v44, %v77
      %vm89 = vcmp.eq.s32.totalorder %v44, %v81
      %vm90 = vcmp.eq.s32.totalorder %v45, %v77
      %vm91 = vcmp.eq.s32.totalorder %v45, %v81
      %vm92 = vcmp.eq.s32.totalorder %v46, %v77
      %vm93 = vcmp.eq.s32.totalorder %v46, %v81
      %vm94 = vcmp.eq.s32.totalorder %v47, %v77
      %vm95 = vcmp.eq.s32.totalorder %v47, %v81
      %vm96 = vcmp.eq.s32.totalorder %v48, %v77
      %vm97 = vcmp.eq.s32.totalorder %v48, %v81
      %vm98 = vcmp.eq.s32.totalorder %v49, %v77
      %vm99 = vcmp.eq.s32.totalorder %v49, %v81
      %vm100 = vcmp.eq.s32.totalorder %v50, %v77
      %vm101 = vcmp.eq.s32.totalorder %v50, %v81
      %vm102 = vcmp.eq.s32.totalorder %v51, %v77
      %vm103 = vcmp.eq.s32.totalorder %v51, %v81
      %vm104 = vcmp.eq.s32.totalorder %v52, %v77
      %vm105 = vcmp.eq.s32.totalorder %v52, %v81
      %vm106 = vcmp.eq.s32.totalorder %v53, %v77
      %vm107 = vcmp.eq.s32.totalorder %v53, %v81
      %vm108 = vcmp.eq.s32.totalorder %v54, %v77
      %vm109 = vcmp.eq.s32.totalorder %v54, %v81
      %vm110 = vcmp.eq.s32.totalorder %v55, %v77
      %vm111 = vcmp.eq.s32.totalorder %v55, %v81
      %vm112 = vcmp.eq.s32.totalorder %v56, %v77
      %vm113 = vcmp.eq.s32.totalorder %v56, %v81
      %vm114 = vcmp.eq.s32.totalorder %v57, %v77
      %vm115 = vcmp.eq.s32.totalorder %v57, %v81
      %vm116 = vcmp.eq.s32.totalorder %v58, %v77
      %vm117 = vcmp.eq.s32.totalorder %v58, %v81
      %vm118 = vcmp.eq.s32.totalorder %v59, %v77
      %vm119 = vcmp.eq.s32.totalorder %v59, %v81
      %vm120 = vcmp.eq.s32.totalorder %v60, %v77
      %vm121 = vcmp.eq.s32.totalorder %v60, %v81
      %vm122 = vcmp.eq.s32.totalorder %v61, %v77
      %vm123 = vcmp.eq.s32.totalorder %v61, %v81
      %vm124 = vcmp.eq.s32.totalorder %v62, %v77
      %vm125 = vcmp.eq.s32.totalorder %v62, %v81
      %vm126 = vcmp.eq.s32.totalorder %v63, %v77
      %vm127 = vcmp.eq.s32.totalorder %v63, %v81
      %vm128 = vcmp.eq.s32.totalorder %v64, %v77
      %vm129 = vcmp.eq.s32.totalorder %v64, %v81
      %vm130 = vcmp.eq.s32.totalorder %v65, %v77
      %vm131 = vcmp.eq.s32.totalorder %v65, %v81
      %vm132 = vcmp.eq.s32.totalorder %v66, %v77
      %vm133 = vcmp.eq.s32.totalorder %v66, %v81
      %vm134 = vcmp.eq.s32.totalorder %v67, %v77
      %vm135 = vcmp.eq.s32.totalorder %v67, %v81
      %vm136 = vcmp.eq.s32.totalorder %v68, %v77
      %vm137 = vcmp.eq.s32.totalorder %v68, %v81
      %vm138 = vcmp.eq.s32.totalorder %v69, %v77
      %vm139 = vcmp.eq.s32.totalorder %v69, %v81
      %vm140 = vcmp.eq.s32.totalorder %v70, %v77
      %vm141 = vcmp.eq.s32.totalorder %v70, %v81
      %vm142 = vcmp.eq.s32.totalorder %v71, %v77
      %vm143 = vcmp.eq.s32.totalorder %v71, %v81
      %vm144 = vcmp.eq.s32.totalorder %v72, %v77
      %vm145 = vcmp.eq.s32.totalorder %v72, %v81
      %v146 = vsel %vm82, 1, 0
      %v147 = vsel %vm83, 1, 0
      %v148 = vsel %vm84, 1, 0
      %v149 = vsel %vm85, 1, 0
      %v150 = vsel %vm86, 1, 0
      %v151 = vsel %vm87, 1, 0
      %v152 = vsel %vm88, 1, 0
      %v153 = vsel %vm89, 1, 0
      %v154 = vsel %vm90, 1, 0
      %v155 = vsel %vm91, 1, 0
      %v156 = vsel %vm92, 1, 0
      %v157 = vsel %vm93, 1, 0
      %v158 = vsel %vm94, 1, 0
      %v159 = vsel %vm95, 1, 0
      %v160 = vsel %vm96, 1, 0
      %v161 = vsel %vm97, 1, 0
      %v162 = vsel %vm98, 1, 0
      %v163 = vsel %vm99, 1, 0
      %v164 = vsel %vm100, 1, 0
      %v165 = vsel %vm101, 1, 0
      %v166 = vsel %vm102, 1, 0
      %v167 = vsel %vm103, 1, 0
      %v168 = vsel %vm104, 1, 0
      %v169 = vsel %vm105, 1, 0
      %v170 = vsel %vm106, 1, 0
      %v171 = vsel %vm107, 1, 0
      %v172 = vsel %vm108, 1, 0
      %v173 = vsel %vm109, 1, 0
      %v174 = vsel %vm110, 1, 0
      %v175 = vsel %vm111, 1, 0
      %v176 = vsel %vm112, 1, 0
      %v177 = vsel %vm113, 1, 0
      %v178 = vsel %vm114, 1, 0
      %v179 = vsel %vm115, 1, 0
      %v180 = vsel %vm116, 1, 0
      %v181 = vsel %vm117, 1, 0
      %v182 = vsel %vm118, 1, 0
      %v183 = vsel %vm119, 1, 0
      %v184 = vsel %vm120, 1, 0
      %v185 = vsel %vm121, 1, 0
      %v186 = vsel %vm122, 1, 0
      %v187 = vsel %vm123, 1, 0
      %v188 = vsel %vm124, 1, 0
      %v189 = vsel %vm125, 1, 0
      %v190 = vsel %vm126, 1, 0
      %v191 = vsel %vm127, 1, 0
      %v192 = vsel %vm128, 1, 0
      %v193 = vsel %vm129, 1, 0
      %v194 = vsel %vm130, 1, 0
      %v195 = vsel %vm131, 1, 0
      %v196 = vsel %vm132, 1, 0
      %v197 = vsel %vm133, 1, 0
      %v198 = vsel %vm134, 1, 0
      %v199 = vsel %vm135, 1, 0
      %v200 = vsel %vm136, 1, 0
      %v201 = vsel %vm137, 1, 0
      %v202 = vsel %vm138, 1, 0
      %v203 = vsel %vm139, 1, 0
      %v204 = vsel %vm140, 1, 0
      %v205 = vsel %vm141, 1, 0
      %v206 = vsel %vm142, 1, 0
      %v207 = vsel %vm143, 1, 0
      %v208 = vsel %vm144, 1, 0
      %v209 = vsel %vm145, 1, 0
      %v210 = vcvt.s32.f32 %v146
      %v211 = vcvt.s32.f32 %v147
      %v212 = vcvt.s32.f32 %v148
      %v213 = vcvt.s32.f32 %v149
      %v214 = vcvt.s32.f32 %v150
      %v215 = vcvt.s32.f32 %v151
      %v216 = vcvt.s32.f32 %v152
      %v217 = vcvt.s32.f32 %v153
      %v218 = vcvt.s32.f32 %v154
      %v219 = vcvt.s32.f32 %v155
      %v220 = vcvt.s32.f32 %v156
      %v221 = vcvt.s32.f32 %v157
      %v222 = vcvt.s32.f32 %v158
      %v223 = vcvt.s32.f32 %v159
      %v224 = vcvt.s32.f32 %v160
      %v225 = vcvt.s32.f32 %v161
      %v226 = vcvt.s32.f32 %v162
      %v227 = vcvt.s32.f32 %v163
      %v228 = vcvt.s32.f32 %v164
      %v229 = vcvt.s32.f32 %v165
      %v230 = vcvt.s32.f32 %v166
      %v231 = vcvt.s32.f32 %v167
      %v232 = vcvt.s32.f32 %v168
      %v233 = vcvt.s32.f32 %v169
      %v234 = vcvt.s32.f32 %v170
      %v235 = vcvt.s32.f32 %v171
      %v236 = vcvt.s32.f32 %v172
      %v237 = vcvt.s32.f32 %v173
      %v238 = vcvt.s32.f32 %v174
      %v239 = vcvt.s32.f32 %v175
      %v240 = vcvt.s32.f32 %v176
      %v241 = vcvt.s32.f32 %v177
      %v242 = vcvt.s32.f32 %v178
      %v243 = vcvt.s32.f32 %v179
      %v244 = vcvt.s32.f32 %v180
      %v245 = vcvt.s32.f32 %v181
      %v246 = vcvt.s32.f32 %v182
      %v247 = vcvt.s32.f32 %v183
      %v248 = vcvt.s32.f32 %v184
      %v249 = vcvt.s32.f32 %v185
      %v250 = vcvt.s32.f32 %v186
      %v251 = vcvt.s32.f32 %v187
      %v252 = vcvt.s32.f32 %v188
      %v253 = vcvt.s32.f32 %v189
      %v254 = vcvt.s32.f32 %v190
      %v255 = vcvt.s32.f32 %v191
      %v256 = vcvt.s32.f32 %v192
      %v257 = vcvt.s32.f32 %v193
      %v258 = vcvt.s32.f32 %v194
      %v259 = vcvt.s32.f32 %v195
      %v260 = vcvt.s32.f32 %v196
      %v261 = vcvt.s32.f32 %v197
      %v262 = vcvt.s32.f32 %v198
      %v263 = vcvt.s32.f32 %v199
      %v264 = vcvt.s32.f32 %v200
      %v265 = vcvt.s32.f32 %v201
      %v266 = vcvt.s32.f32 %v202
      %v267 = vcvt.s32.f32 %v203
      %v268 = vcvt.s32.f32 %v204
      %v269 = vcvt.s32.f32 %v205
      %v270 = vcvt.s32.f32 %v206
      %v271 = vcvt.s32.f32 %v207
      %v272 = vcvt.s32.f32 %v208
      %v273 = vcvt.s32.f32 %v209
      %274 = vst [vmem:[#allocation2] sm:$0xff] %v210
      %275 = vst [vmem:[#allocation2 + $0x8] sm:$0xff] %v211
      %276 = vst [vmem:[#allocation2 + $0x10] sm:$0xff] %v212
      %277 = vst [vmem:[#allocation2 + $0x18] sm:$0xff] %v213
      %278 = vst [vmem:[#allocation2 + $0x20] sm:$0xff] %v214
      %279 = vst [vmem:[#allocation2 + $0x28] sm:$0xff] %v215
      %280 = vst [vmem:[#allocation2 + $0x30] sm:$0xff] %v216
      %281 = vst [vmem:[#allocation2 + $0x38] sm:$0xff] %v217
      %282 = vst [vmem:[#allocation2 + $0x40] sm:$0xff] %v218
      %283 = vst [vmem:[#allocation2 + $0x48] sm:$0xff] %v219
      %284 = vst [vmem:[#allocation2 + $0x50] sm:$0xff] %v220
      %285 = vst [vmem:[#allocation2 + $0x58] sm:$0xff] %v221
      %286 = vst [vmem:[#allocation2 + $0x60] sm:$0xff] %v222
      %287 = vst [vmem:[#allocation2 + $0x68] sm:$0xff] %v223
      %288 = vst [vmem:[#allocation2 + $0x70] sm:$0xff] %v224
      %289 = vst [vmem:[#allocation2 + $0x78] sm:$0xff] %v225
      %290 = vst [vmem:[#allocation2 + $0x80] sm:$0xff] %v226
      %291 = vst [vmem:[#allocation2 + $0x88] sm:$0xff] %v227
      %292 = vst [vmem:[#allocation2 + $0x90] sm:$0xff] %v228
      %293 = vst [vmem:[#allocation2 + $0x98] sm:$0xff] %v229
      %294 = vst [vmem:[#allocation2 + $0xa0] sm:$0xff] %v230
      %295 = vst [vmem:[#allocation2 + $0xa8] sm:$0xff] %v231
      %296 = vst [vmem:[#allocation2 + $0xb0] sm:$0xff] %v232
      %297 = vst [vmem:[#allocation2 + $0xb8] sm:$0xff] %v233
      %298 = vst [vmem:[#allocation2 + $0xc0] sm:$0xff] %v234
      %299 = vst [vmem:[#allocation2 + $0xc8] sm:$0xff] %v235
      %300 = vst [vmem:[#allocation2 + $0xd0] sm:$0xff] %v236
      %301 = vst [vmem:[#allocation2 + $0xd8] sm:$0xff] %v237
      %302 = vst [vmem:[#allocation2 + $0xe0] sm:$0xff] %v238
      %303 = vst [vmem:[#allocation2 + $0xe8] sm:$0xff] %v239
      %304 = vst [vmem:[#allocation2 + $0xf0] sm:$0xff] %v240
      %305 = vst [vmem:[#allocation2 + $0xf8] sm:$0xff] %v241
      %306 = vst [vmem:[#allocation2 + $0x100] sm:$0xff] %v242
      %307 = vst [vmem:[#allocation2 + $0x108] sm:$0xff] %v243
      %308 = vst [vmem:[#allocation2 + $0x110] sm:$0xff] %v244
      %309 = vst [vmem:[#allocation2 + $0x118] sm:$0xff] %v245
      %310 = vst [vmem:[#allocation2 + $0x120] sm:$0xff] %v246
      %311 = vst [vmem:[#allocation2 + $0x128] sm:$0xff] %v247
      %312 = vst [vmem:[#allocation2 + $0x130] sm:$0xff] %v248
      %313 = vst [vmem:[#allocation2 + $0x138] sm:$0xff] %v249
      %314 = vst [vmem:[#allocation2 + $0x140] sm:$0xff] %v250
      %315 = vst [vmem:[#allocation2 + $0x148] sm:$0xff] %v251
      %316 = vst [vmem:[#allocation2 + $0x150] sm:$0xff] %v252
      %317 = vst [vmem:[#allocation2 + $0x158] sm:$0xff] %v253
      %318 = vst [vmem:[#allocation2 + $0x160] sm:$0xff] %v254
      %319 = vst [vmem:[#allocation2 + $0x168] sm:$0xff] %v255
      %320 = vst [vmem:[#allocation2 + $0x170] sm:$0xff] %v256
      %321 = vst [vmem:[#allocation2 + $0x178] sm:$0xff] %v257
      %322 = vst [vmem:[#allocation2 + $0x180] sm:$0xff] %v258
      %323 = vst [vmem:[#allocation2 + $0x188] sm:$0xff] %v259
      %324 = vst [vmem:[#allocation2 + $0x190] sm:$0xff] %v260
      %325 = vst [vmem:[#allocation2 + $0x198] sm:$0xff] %v261
      %326 = vst [vmem:[#allocation2 + $0x1a0] sm:$0xff] %v262
      %327 = vst [vmem:[#allocation2 + $0x1a8] sm:$0xff] %v263
      %328 = vst [vmem:[#allocation2 + $0x1b0] sm:$0xff] %v264
      %329 = vst [vmem:[#allocation2 + $0x1b8] sm:$0xff] %v265
      %330 = vst [vmem:[#allocation2 + $0x1c0] sm:$0xff] %v266
      %331 = vst [vmem:[#allocation2 + $0x1c8] sm:$0xff] %v267
      %332 = vst [vmem:[#allocation2 + $0x1d0] sm:$0xff] %v268
      %333 = vst [vmem:[#allocation2 + $0x1d8] sm:$0xff] %v269
      %334 = vst [vmem:[#allocation2 + $0x1e0] sm:$0xff] %v270
      %335 = vst [vmem:[#allocation2 + $0x1e8] sm:$0xff] %v271
      %336 = vst [vmem:[#allocation2 + $0x1f0] sm:$0xff] %v272
      %337 = vst [vmem:[#allocation2 + $0x1f8] sm:$0xff] %v273
    $region21: #{tpu_custom_call.1} parent=1 // pred_fallthru
      _
    %v338 = vld [vmem:[#allocation6] sm:$0xff]
    %v339 = vld [vmem:[#allocation6 + $0x8] sm:$0xff]
    %v340 = vld [vmem:[#allocation2] sm:$0xff]
    %v341 = vld [vmem:[#allocation2 + $0x8] sm:$0xff]
    %v342 = vld [vmem:[#allocation2 + $0x10] sm:$0xff]
    %v343 = vld [vmem:[#allocation2 + $0x18] sm:$0xff]
    %v344 = vld [vmem:[#allocation2 + $0x20] sm:$0xff]
    %v345 = vld [vmem:[#allocation2 + $0x28] sm:$0xff]
    %v346 = vld [vmem:[#allocation2 + $0x30] sm:$0xff]
    %v347 = vld [vmem:[#allocation2 + $0x38] sm:$0xff]
    %v348 = vld [vmem:[#allocation2 + $0x40] sm:$0xff]
    %v349 = vld [vmem:[#allocation2 + $0x48] sm:$0xff]
    %v350 = vld [vmem:[#allocation2 + $0x50] sm:$0xff]
    %v351 = vld [vmem:[#allocation2 + $0x58] sm:$0xff]
    %v352 = vld [vmem:[#allocation2 + $0x60] sm:$0xff]
    %v353 = vld [vmem:[#allocation2 + $0x68] sm:$0xff]
    %v354 = vld [vmem:[#allocation2 + $0x70] sm:$0xff]
    %v355 = vld [vmem:[#allocation2 + $0x78] sm:$0xff]
    %v356 = vld [vmem:[#allocation2 + $0x80] sm:$0xff]
    %v357 = vld [vmem:[#allocation2 + $0x88] sm:$0xff]
    %v358 = vld [vmem:[#allocation2 + $0x90] sm:$0xff]
    %v359 = vld [vmem:[#allocation2 + $0x98] sm:$0xff]
    %v360 = vld [vmem:[#allocation2 + $0xa0] sm:$0xff]
    %v361 = vld [vmem:[#allocation2 + $0xa8] sm:$0xff]
    %v362 = vld [vmem:[#allocation2 + $0xb0] sm:$0xff]
    %v363 = vld [vmem:[#allocation2 + $0xb8] sm:$0xff]
    %v364 = vld [vmem:[#allocation2 + $0xc0] sm:$0xff]
    %v365 = vld [vmem:[#allocation2 + $0xc8] sm:$0xff]
    %v366 = vld [vmem:[#allocation2 + $0xd0] sm:$0xff]
    %v367 = vld [vmem:[#allocation2 + $0xd8] sm:$0xff]
    %v368 = vld [vmem:[#allocation2 + $0xe0] sm:$0xff]
    %v369 = vld [vmem:[#allocation2 + $0xe8] sm:$0xff]
    %v370 = vld [vmem:[#allocation2 + $0xf0] sm:$0xff]
    %v371 = vld [vmem:[#allocation2 + $0xf8] sm:$0xff]
    %v372 = vld [vmem:[#allocation2 + $0x100] sm:$0xff]
    %v373 = vld [vmem:[#allocation2 + $0x108] sm:$0xff]
    %v374 = vld [vmem:[#allocation2 + $0x110] sm:$0xff]
    %v375 = vld [vmem:[#allocation2 + $0x118] sm:$0xff]
    %v376 = vld [vmem:[#allocation2 + $0x120] sm:$0xff]
    %v377 = vld [vmem:[#allocation2 + $0x128] sm:$0xff]
    %v378 = vld [vmem:[#allocation2 + $0x130] sm:$0xff]
    %v379 = vld [vmem:[#allocation2 + $0x138] sm:$0xff]
    %v380 = vld [vmem:[#allocation2 + $0x140] sm:$0xff]
    %v381 = vld [vmem:[#allocation2 + $0x148] sm:$0xff]
    %v382 = vld [vmem:[#allocation2 + $0x150] sm:$0xff]
    %v383 = vld [vmem:[#allocation2 + $0x158] sm:$0xff]
    %v384 = vld [vmem:[#allocation2 + $0x160] sm:$0xff]
    %v385 = vld [vmem:[#allocation2 + $0x168] sm:$0xff]
    %v386 = vld [vmem:[#allocation2 + $0x170] sm:$0xff]
    %v387 = vld [vmem:[#allocation2 + $0x178] sm:$0xff]
    %v388 = vld [vmem:[#allocation2 + $0x180] sm:$0xff]
    %v389 = vld [vmem:[#allocation2 + $0x188] sm:$0xff]
    %v390 = vld [vmem:[#allocation2 + $0x190] sm:$0xff]
    %v391 = vld [vmem:[#allocation2 + $0x198] sm:$0xff]
    %v392 = vld [vmem:[#allocation2 + $0x1a0] sm:$0xff]
    %v393 = vld [vmem:[#allocation2 + $0x1a8] sm:$0xff]
    %v394 = vld [vmem:[#allocation2 + $0x1b0] sm:$0xff]
    %v395 = vld [vmem:[#allocation2 + $0x1b8] sm:$0xff]
    %v396 = vld [vmem:[#allocation2 + $0x1c0] sm:$0xff]
    %v397 = vld [vmem:[#allocation2 + $0x1c8] sm:$0xff]
    %v398 = vld [vmem:[#allocation2 + $0x1d0] sm:$0xff]
    %v399 = vld [vmem:[#allocation2 + $0x1d8] sm:$0xff]
    %v400 = vld [vmem:[#allocation2 + $0x1e0] sm:$0xff]
    %v401 = vld [vmem:[#allocation2 + $0x1e8] sm:$0xff]
    %v402 = vld [vmem:[#allocation2 + $0x1f0] sm:$0xff]
    %v403 = vld [vmem:[#allocation2 + $0x1f8] sm:$0xff]
    %404 = vmatprep.subr.mxu0 %v371
    %405 = vmatpush1.msra.mxu0 %v370
    %406 = vmatprep.subr.mxu0 %v369
    %407 = vmatpush1.msra.mxu0 %v368
    %408 = vmatprep.subr.mxu0 %v367
    %409 = vmatpush1.msra.mxu0 %v366
    %410 = vmatprep.subr.mxu0 %v365
    %411 = vmatpush1.msra.mxu0 %v364
    %412 = vmatprep.subr.mxu0 %v363
    %413 = vmatpush1.msra.mxu0 %v362
    %414 = vmatprep.subr.mxu0 %v361
    %415 = vmatpush1.msra.mxu0 %v360
    %416 = vmatprep.subr.mxu0 %v359
    %417 = vmatpush1.msra.mxu0 %v358
    %418 = vmatprep.subr.mxu0 %v357
    %419 = vmatpush1.msra.mxu0 %v356
    %420 = vmatprep.subr.mxu0 %v355
    %421 = vmatpush1.msra.mxu0 %v354
    %422 = vmatprep.subr.mxu0 %v353
    %423 = vmatpush1.msra.mxu0 %v352
    %424 = vmatprep.subr.mxu0 %v351
    %425 = vmatpush1.msra.mxu0 %v350
    %426 = vmatprep.subr.mxu0 %v349
    %427 = vmatpush1.msra.mxu0 %v348
    %428 = vmatprep.subr.mxu0 %v347
    %429 = vmatpush1.msra.mxu0 %v346
    %430 = vmatprep.subr.mxu0 %v345
    %431 = vmatpush1.msra.mxu0 %v344
    %432 = vmatprep.subr.mxu0 %v343
    %433 = vmatpush1.msra.mxu0 %v342
    %434 = vmatprep.subr.mxu0 %v341
    %435 = vmatpush1.msra.mxu0 %v340
    %436 = vmatprep.subr.mxu0 %v403
    %437 = vmatpush2.msra.mxu0 %v402
    %438 = vmatprep.subr.mxu0 %v401
    %439 = vmatpush2.msra.mxu0 %v400
    %440 = vmatprep.subr.mxu0 %v399
    %441 = vmatpush2.msra.mxu0 %v398
    %442 = vmatprep.subr.mxu0 %v397
    %443 = vmatpush2.msra.mxu0 %v396
    %444 = vmatprep.subr.mxu0 %v395
    %445 = vmatpush2.msra.mxu0 %v394
    %446 = vmatprep.subr.mxu0 %v393
    %447 = vmatpush2.msra.mxu0 %v392
    %448 = vmatprep.subr.mxu0 %v391
    %449 = vmatpush2.msra.mxu0 %v390
    %450 = vmatprep.subr.mxu0 %v389
    %451 = vmatpush2.msra.mxu0 %v388
    %452 = vmatprep.subr.mxu0 %v387
    %453 = vmatpush2.msra.mxu0 %v386
    %454 = vmatprep.subr.mxu0 %v385
    %455 = vmatpush2.msra.mxu0 %v384
    %456 = vmatprep.subr.mxu0 %v383
    %457 = vmatpush2.msra.mxu0 %v382
    %458 = vmatprep.subr.mxu0 %v381
    %459 = vmatpush2.msra.mxu0 %v380
    %460 = vmatprep.subr.mxu0 %v379
    %461 = vmatpush2.msra.mxu0 %v378
    %462 = vmatprep.subr.mxu0 %v377
    %463 = vmatpush2.msra.mxu0 %v376
    %464 = vmatprep.subr.mxu0 %v375
    %465 = vmatpush2.msra.mxu0 %v374
    %466 = vmatprep.subr.mxu0 %v373
    %467 = vmatpush2.msra.mxu0 %v372
    %468 = vmatprep.mubr.f32.mxu0 %v339
    %469 = vmatmul.mubr.f32.gmra.mxu0 %v338
    %v470 = vpop.f32.mrf.mxu0
    %v471 = vadd.f32 0.0, %v470
    %v472 = vpop.f32.mrf.mxu0
    %v473 = vadd.f32 0.0, %v472
    %474 = vdwg.mxu0
    %475 = vst [vmem:[#allocation8] sm:$0xff] %v471
    %476 = vst [vmem:[#allocation8 + $0x8] sm:$0xff] %v473
    // Predicated region
    $region22: #{tpu_custom_call.1} parent=1 // pred_check
      _
    $region23: #{tpu_custom_call.1} parent=1 // pred_check_branch
      %478 = sbr.rel (0) target = $region25
    $region24: #{tpu_custom_call.1} parent=1 // pred_region
      %s480 = ssub.s32 256, 256
      %481 = vsyncadd [#allocation5], %s480
      %s483 = sshll.u32 [#allocation8], 4
      %s484 = int_to_ptr.vmem [resolvable:$true] %s483
      %486 = dma.vmem_to_hbm [thread:$0]  %s484, 256, %s2, [#allocation5]
    $region25: #{tpu_custom_call.1} parent=1 // pred_fallthru
      _
    // Predicated region
    $region26: #{tpu_custom_call.1} parent=1 // pred_check
      _
    $region27: #{tpu_custom_call.1} parent=1 // pred_check_branch
      %488 = sbr.rel (0) target = $region29
    $region28: #{tpu_custom_call.1} parent=1 // pred_region
      %489 = dma.done [#allocation5], 256
    $region29: #{tpu_custom_call.1} parent=1 // pred_fallthru
      _
    %490 = vsyncpa [#allocation4], 1
    %491 = vsyncpa [#allocation7], 1
    %492 = vsyncpa [#allocation5], 1

</llo_original>
